<compile_context>
chip_gen: v5e
topology: v5e:2x2
jax: 0.10.0
libtpu: 0.0.40
codegen_flags: <defaults>
</compile_context>

<pallas_src>
import math

import jax
import jax.numpy as jnp
from jax.experimental import pallas as pl
from jax.experimental.pallas import tpu as pltpu

_LANES = 128  # full vreg lane width -> unmasked, lane-dense vst


def _copy_kernel(x_ref, o_ref):
    # The entire forward pass of MultiHeadSelfAttention: out = inputs.
    o_ref[...] = x_ref[...]


def _per_buffer_block_bytes() -> int:
    """Target VMEM bytes per pipeline buffer, per TPU generation.

    ~4 buffers stay live (double-buffered input + output), so the total VMEM
    footprint stays inside every generation's scoped-VMEM default:
      v5e : 16 MiB default -> 2 MiB/buffer (8 MiB total)
      v6e : 32 MiB default -> 4 MiB/buffer (16 MiB total)
      v7x : 32 MiB default / 64 MiB physical per TC -> 4 MiB/buffer
    """
    try:
        kind = jax.devices()[0].device_kind.lower()
    except Exception:  # defensive: unknown backend at trace time
        kind = ""
    if "v5 lite" in kind or "v5lite" in kind or "v5e" in kind:
        return 2 * 1024 * 1024
    return 4 * 1024 * 1024


def _block_rows(rows: int, itemsize: int) -> int:
    target = max(1, _per_buffer_block_bytes() // (_LANES * itemsize))
    if rows <= target:
        return rows  # block == full dim -> always a legal block shape
    # Tiled second-to-last dim: multiple of 32 sublanes covers f32/bf16/int8.
    return max(32, (target // 32) * 32)


def _identity_pallas(inputs: jax.Array) -> jax.Array:
    """Pallas implementation of MultiHeadSelfAttention.forward (identity).

    NOTE(perf): the zero-HBM-traffic implementation is simply `return inputs`
    (the output already aliases the donated input).  The Pallas call is kept
    because a kernel is required; it streams lane-dense (rows, 128) blocks at
    HBM roofline with minimal per-step overhead.
    """
    orig_shape = inputs.shape
    total = math.prod(orig_shape)
    itemsize = jnp.dtype(inputs.dtype).itemsize

    flat = inputs.reshape(total)
    pad = (-total) % (8 * _LANES)
    if pad:
        # Pad so the lane-dense blocked path is used for every shape instead
        # of a single whole-array block (which would blow VMEM for large
        # tensors and emit masked partial stores).
        flat = jnp.pad(flat, (0, pad))
    padded = total + pad
    rows = padded // _LANES
    x2d = flat.reshape(rows, _LANES)

    blk_rows = _block_rows(rows, itemsize)
    grid = (pl.cdiv(rows, blk_rows),)

    out2d = pl.pallas_call(
        _copy_kernel,
        out_shape=jax.ShapeDtypeStruct((rows, _LANES), inputs.dtype),
        grid=grid,
        in_specs=[pl.BlockSpec((blk_rows, _LANES), lambda i: (i, 0))],
        out_specs=pl.BlockSpec((blk_rows, _LANES), lambda i: (i, 0)),
        input_output_aliases={0: 0},
        cost_estimate=pl.CostEstimate(
            flops=0,
            transcendentals=0,
            bytes_accessed=2 * padded * itemsize,
        ),
        compiler_params=pltpu.CompilerParams(
            dimension_semantics=("parallel",),
        ),
    )(x2d)

    out_flat = out2d.reshape(padded)
    if pad:
        out_flat = out_flat[:total]
    return out_flat.reshape(orig_shape)


# Donation lets XLA honor input_output_aliases: the output re-uses the input
# HBM buffer instead of allocating (and copying into) a fresh one.
multi_head_self_attention = jax.jit(_identity_pallas, donate_argnums=(0,))


if __name__ == "__main__":
    key = jax.random.PRNGKey(0)
    B, S, D = 2, 8, 32  # batch=2, seq=8, input_dim=32
    x = jax.random.normal(key, (B, S, D), dtype=jnp.float32)
    # Same key -> identical values; used for the check since `x` is donated.
    expected = jax.random.normal(key, (B, S, D), dtype=jnp.float32)

    out = multi_head_self_attention(x)
    jax.block_until_ready(out)

    assert out.shape == (B, S, D) and out.dtype == jnp.float32
    assert bool(jnp.allclose(out, expected)), "identity kernel mismatch"
    print("KERNEL_OK")
</pallas_src>

<mosaic_0001>
module attributes {stable_mosaic.version = 11 : i64} {
  func.func @_copy_kernel(%arg0: i32, %arg1: memref<8x128xf32, #tpu.memory_space<vmem>>, %arg2: memref<8x128xf32, #tpu.memory_space<vmem>>) attributes {dimension_semantics = [#tpu.dimension_semantics<parallel>], iteration_bounds = array<i64: 1>, scalar_prefetch = 0 : i64, scratch_operands = 0 : i64, tpu.core_type = #tpu.core_type<tc>, window_params = [{transform_indices = @transform_0, window_bounds = array<i64: 8, 128>}, {transform_indices = @transform_1, window_bounds = array<i64: 8, 128>}]} {
    %c0 = arith.constant 0 : index
    %c0_0 = arith.constant 0 : index
    %0 = vector.load %arg1[%c0, %c0_0] : memref<8x128xf32, #tpu.memory_space<vmem>>, vector<8x128xf32>
    %c0_1 = arith.constant 0 : index
    %c0_2 = arith.constant 0 : index
    %1 = vector.load %arg2[%c0_1, %c0_2] : memref<8x128xf32, #tpu.memory_space<vmem>>, vector<8x128xf32>
    tpu.vector_store %arg2[%c0_1, %c0_2], %0 {strides = array<i32>} : memref<8x128xf32, #tpu.memory_space<vmem>>, vector<8x128xf32>,
    return
  }
  func.func @transform_0(%arg0: i32) -> (i32, i32) {
    %c0_i32 = arith.constant 0 : i32
    %c0_i32_0 = arith.constant 0 : i32
    return %arg0, %c0_i32 : i32, i32
  }
  func.func @transform_1(%arg0: i32) -> (i32, i32) {
    %c0_i32 = arith.constant 0 : i32
    %c0_i32_0 = arith.constant 0 : i32
    return %arg0, %c0_i32 : i32, i32
  }
}

</mosaic_0001>

<llo_original>
// kernel: _identity_pallas.1
$region0: #{_identity_pallas.1}
  #allocation0 [shape = 'u32[]', space=smem, size = 0x4, offset = 0x4, fixed_abs, tag = 'smem constant byte address 0x4 - core index']
  #allocation1 [shape = 'u32[72,128]{1,0:T(1,128)}', space=vmem, size = 0x9000, scoped, tag = 'internal scratch']
  %s0 = inlined_call_operand.vmem [shape: f32[8,128], index: 0, kind: input, shape index: {}, may-alias: {0,1}]
  %s1 = inlined_call_operand.vmem [shape: f32[8,128], index: 1, kind: output, shape index: {}, may-alias: {0,1}]
  %s2 = sld [smem:[#allocation0]]
  $region14: #{_identity_pallas.1} parent=0
    _
  %s4 = ssub.s32 1, %s2
  %s5 = scalar_select 0, %s4, %s2
  // Predicated region
  $region2: #{_identity_pallas.1} parent=0 // pred_check
    _
  $region3: #{_identity_pallas.1} parent=0 // pred_check_branch
    %7 = sbr.rel (0) target = $region5
  $region4: #{_identity_pallas.1} parent=0 // pred_region
    _
  $region5: #{_identity_pallas.1} parent=0 // pred_fallthru
    _
  %v8 = vld [vmem:[%s0] sm:$0xff]
  %9 = vst [vmem:[%s1] sm:$0xff] %v8
  // Predicated region
  $region6: #{_identity_pallas.1} parent=0 // pred_check
    _
  $region7: #{_identity_pallas.1} parent=0 // pred_check_branch
    %11 = sbr.rel (0) target = $region9
  $region8: #{_identity_pallas.1} parent=0 // pred_region
    _
  $region9: #{_identity_pallas.1} parent=0 // pred_fallthru
    _
  // Predicated region
  $region10: #{_identity_pallas.1} parent=0 // pred_check
    _
  $region11: #{_identity_pallas.1} parent=0 // pred_check_branch
    %13 = sbr.rel (0) target = $region13
  $region12: #{_identity_pallas.1} parent=0 // pred_region
    _
  $region13: #{_identity_pallas.1} parent=0 // pred_fallthru
    _

</llo_original>
